<compile_context>
chip_gen: v5e
topology: v5e:2x2
jax: 0.10.0
libtpu: 0.0.40
codegen_flags: <defaults>
</compile_context>

<pallas_src>
import functools

import jax
import jax.numpy as jnp
from jax import lax
from jax.experimental import pallas as pl
from jax.experimental.pallas import tpu as pltpu


# ---------------------------------------------------------------------------
# Path A: f32 input — aliased in/out, window-only zero scatter (no reads).
# ---------------------------------------------------------------------------
def _zero_scatter_kernel(count_ref, row_starts_ref, x_ref, o_ref,
                         zeros_ref, sems, *, mask_length):
    """Scatter `mask_length` rows of zeros into the aliased output.

    count_ref      : SMEM (1,)  int32 — number of masked samples m.
    row_starts_ref : SMEM (n,)  int32 — flattened (sample*T + rm) row where the
                     s-th masked sample's zero window begins (valid for s < m).
    x_ref          : HBM (n*t, c) — aliased to o_ref; never read.
    o_ref          : HBM (n*t, c) — output; untouched outside the windows.
    zeros_ref      : VMEM (mask_length, c) — zero source for the scatter DMAs.
    sems           : DMA semaphores (2,) — 2-deep scatter pipeline.
    """
    del x_ref  # aliased to o_ref; data outside the zero windows is kept as-is
    zeros_ref[...] = jnp.zeros_like(zeros_ref)
    m = count_ref[0]

    def copy(s, slot):
        return pltpu.make_async_copy(
            zeros_ref,
            o_ref.at[pl.ds(row_starts_ref[s], mask_length), :],
            sems.at[slot])

    @pl.when(m > 0)
    def _():
        copy(0, 0).start()

        @pl.loop(0, m)
        def _(s):
            slot = s % 2

            @pl.when(s + 1 < m)
            def _():
                copy(s + 1, 1 - slot).start()

            copy(s, slot).wait()


def _mask_encoding_f32_scatter(waveforms, apply_flags, rm_starts, mask_length):
    n, t, c = waveforms.shape
    x2 = waveforms.reshape(n * t, c)           # free row-major reshape

    # Compact the masked samples so the in-kernel loop needs no per-sample
    # conditional and can run a 2-deep DMA pipeline.
    count = jnp.sum(apply_flags).astype(jnp.int32).reshape(1)
    order = jnp.argsort((~apply_flags).astype(jnp.int32)).astype(jnp.int32)
    row_starts = (order * t + rm_starts[order]).astype(jnp.int32)

    out2 = pl.pallas_call(
        functools.partial(_zero_scatter_kernel, mask_length=mask_length),
        out_shape=jax.ShapeDtypeStruct((n * t, c), jnp.float32),
        in_specs=[
            pl.BlockSpec(memory_space=pltpu.MemorySpace.SMEM),   # count
            pl.BlockSpec(memory_space=pltpu.MemorySpace.SMEM),   # row_starts
            pl.BlockSpec(memory_space=pl.ANY),                   # data (aliased)
        ],
        out_specs=pl.BlockSpec(memory_space=pl.ANY),
        scratch_shapes=[
            pltpu.VMEM((mask_length, c), jnp.float32),
            pltpu.SemaphoreType.DMA((2,)),
        ],
        input_output_aliases={2: 0},
    )(count, row_starts, x2)
    return out2.reshape(n, t, c)


# ---------------------------------------------------------------------------
# Path B: non-f32 input — one full pass, window zero + fused cast to f32.
# ---------------------------------------------------------------------------
def _mask_cast_kernel(lo_ref, x_ref, o_ref, *, span):
    x = x_ref[...]
    lo = lo_ref[...]                                       # (block_n, 1) int32
    col = lax.broadcasted_iota(jnp.int32, (1, x.shape[1]), 1)
    # Single unsigned range test: lo <= col < lo + span (sentinel lo==T*C is
    # never hit because col - lo wraps to a huge unsigned value).
    in_window = (col - lo).astype(jnp.uint32) < jnp.uint32(span)
    o_ref[...] = jnp.where(in_window, jnp.zeros((), x.dtype), x).astype(o_ref.dtype)


def _choose_block_rows(n, row_bytes, per_step_budget_bytes=4 << 20):
    """Rows per grid step: fit a ~4 MiB/step budget (double-buffered in+out
    stays far below v7x's 64 MiB VMEM) and leave >= 2 grid steps so both v7x
    TensorCores get work; always a multiple of 8 sublanes."""
    if n <= 8:
        return int(n)
    cap = max(8, per_step_budget_bytes // max(row_bytes, 1))
    half = -(-n // 2)                      # ceil(n / 2): at least two steps
    block = max(8, min(cap, half))
    block -= block % 8
    return int(max(8, min(block, n)))


def _mask_encoding_cast(waveforms, apply_flags, rm_starts, mask_length):
    n, t, c = waveforms.shape
    tc = t * c
    span = mask_length * c

    # Flattened window start per sample; sentinel tc => empty window.
    lo = jnp.where(apply_flags, rm_starts * c, tc).astype(jnp.int32).reshape(n, 1)
    x2 = waveforms.reshape(n, tc)                         # lane-dense layout

    row_bytes = tc * (x2.dtype.itemsize + 4)              # input tile + f32 out tile
    block_n = _choose_block_rows(n, row_bytes)
    grid = (pl.cdiv(n, block_n),)

    out2 = pl.pallas_call(
        functools.partial(_mask_cast_kernel, span=span),
        out_shape=jax.ShapeDtypeStruct((n, tc), jnp.float32),
        grid=grid,
        in_specs=[
            pl.BlockSpec((block_n, 1), lambda i: (i, 0)),     # lo
            pl.BlockSpec((block_n, tc), lambda i: (i, 0)),    # data
        ],
        out_specs=pl.BlockSpec((block_n, tc), lambda i: (i, 0)),
        compiler_params=pltpu.CompilerParams(
            dimension_semantics=("parallel",),
            vmem_limit_bytes=32 << 20,
        ),
    )(lo, x2)
    return out2.reshape(n, t, c)


# ---------------------------------------------------------------------------
# Glue: random decisions + dispatch.
# ---------------------------------------------------------------------------
def _draw_mask_decisions(key, n, t, mask_length, paug, strategy,
                         mini_batch_size=32):
    """Per-sample (apply?, start index) decisions; plain JAX, matches the
    module's distribution (strategy 2: one start shared per mini-batch)."""
    if t - mask_length <= 0:
        raise ValueError(
            f"mask_ratio too large: mask_length={mask_length} >= num_time_steps={t}")
    k_paug, k_rm = jax.random.split(key)
    apply_flags = jax.random.uniform(k_paug, (n,)) < paug
    if strategy == 1:
        rm_starts = jax.random.randint(k_rm, (n,), 0, t - mask_length,
                                       dtype=jnp.int32)
    else:  # strategy == 2: start depends only on batch_idx = sample // 32
        batch_idx = jnp.arange(n, dtype=jnp.int32) // mini_batch_size
        n_batches = -(-n // mini_batch_size)
        per_batch_rm = jax.random.randint(k_rm, (n_batches,), 0,
                                          t - mask_length, dtype=jnp.int32)
        rm_starts = per_batch_rm[batch_idx]
    return apply_flags, rm_starts


def mask_encoding(waveforms, mask_ratio, paug=0.5, strategy=2, *, key):
    """JAX/Pallas equivalent of MaskEncoding.forward (returns f32 data plus
    the drawn decisions for testing).  Pass `key` explicitly."""
    n, t, c = waveforms.shape
    mask_length = int(t * mask_ratio)       # same truncation as the module
    apply_flags, rm_starts = _draw_mask_decisions(
        key, n, t, mask_length, paug, strategy)

    if mask_length == 0:
        return waveforms.astype(jnp.float32), apply_flags, rm_starts

    if waveforms.dtype == jnp.float32:
        out = _mask_encoding_f32_scatter(waveforms, apply_flags, rm_starts,
                                         mask_length)
    else:
        out = _mask_encoding_cast(waveforms, apply_flags, rm_starts,
                                  mask_length)
    return out, apply_flags, rm_starts


if __name__ == "__main__":
    key = jax.random.PRNGKey(0)
    k_data, k_mask, k_data2, k_mask2 = jax.random.split(key, 4)

    run = jax.jit(mask_encoding,
                  static_argnames=("mask_ratio", "paug", "strategy"))

    # --- Path A: f32 input, aliased window-only zero scatter ---------------
    N, T, C = 64, 32, 16
    mask_ratio = 0.25
    mask_length = int(T * mask_ratio)
    waveforms = jax.random.normal(k_data, (N, T, C), dtype=jnp.float32)

    out, apply_flags, rm_starts = run(waveforms, mask_ratio=mask_ratio,
                                      paug=0.5, strategy=2, key=k_mask)
    out = jax.block_until_ready(out)

    t_idx = jnp.arange(T, dtype=jnp.int32)[None, :, None]
    rm = rm_starts[:, None, None]
    window = (t_idx >= rm) & (t_idx < rm + mask_length) & apply_flags[:, None, None]
    expected = jnp.where(window, 0.0, waveforms).astype(jnp.float32)
    assert out.shape == (N, T, C) and out.dtype == jnp.float32
    assert jnp.allclose(out, expected), "f32 scatter path mismatch"

    # --- Path B: bf16 input, full pass with fused .float() cast ------------
    N2 = 16
    wf_bf16 = jax.random.normal(k_data2, (N2, T, C), dtype=jnp.bfloat16)
    out2, flags2, rm2 = run(wf_bf16, mask_ratio=mask_ratio, paug=0.5,
                            strategy=1, key=k_mask2)
    out2 = jax.block_until_ready(out2)

    rm2b = rm2[:, None, None]
    window2 = (t_idx >= rm2b) & (t_idx < rm2b + mask_length) & flags2[:, None, None]
    expected2 = jnp.where(window2, 0.0, wf_bf16.astype(jnp.float32))
    assert out2.shape == (N2, T, C) and out2.dtype == jnp.float32
    assert jnp.allclose(out2, expected2), "bf16 fused-cast path mismatch"

    print("KERNEL_OK")
</pallas_src>

<mosaic_0001>
module attributes {stable_mosaic.version = 11 : i64} {
  func.func @_zero_scatter_kernel(%arg0: memref<1xi32, #tpu.memory_space<smem>>, %arg1: memref<64xi32, #tpu.memory_space<smem>>, %arg2: memref<2048x16xf32, #tpu.memory_space<any>>, %arg3: memref<2048x16xf32, #tpu.memory_space<any>>, %arg4: memref<8x16xf32, #tpu.memory_space<vmem>>, %arg5: memref<2x!tpu.dma_semaphore, #tpu.memory_space<semaphore_mem>>) attributes {dimension_semantics = [], scalar_prefetch = 0 : i64, scratch_operands = 2 : i64, tpu.core_type = #tpu.core_type<tc>} {
    %cst = arith.constant 0.000000e+00 : f32
    %0 = vector.broadcast %cst : f32 to vector<8x16xf32>
    %c0 = arith.constant 0 : index
    %c0_0 = arith.constant 0 : index
    %1 = vector.load %arg4[%c0, %c0_0] : memref<8x16xf32, #tpu.memory_space<vmem>>, vector<8x16xf32>
    tpu.vector_store %arg4[%c0, %c0_0], %0 {strides = array<i32>} : memref<8x16xf32, #tpu.memory_space<vmem>>, vector<8x16xf32>,
    %c0_1 = arith.constant 0 : index
    %2 = memref.load %arg0[%c0_1] : memref<1xi32, #tpu.memory_space<smem>>
    %c0_i32 = arith.constant 0 : i32
    %3 = arith.cmpi sgt, %2, %c0_i32 : i32
    %4 = arith.extui %3 : i1 to i32
    %c0_i32_2 = arith.constant 0 : i32
    %5 = arith.cmpi ne, %4, %c0_i32_2 : i32
    scf.if %5 {
      %c0_3 = arith.constant 0 : index
      %6 = memref.load %arg1[%c0_3] : memref<64xi32, #tpu.memory_space<smem>>
      %c0_i32_4 = arith.constant 0 : i32
      %c0_i32_5 = arith.constant 0 : i32
      %7 = tpu.memref_slice %arg3[%6, %c0_i32_5] : memref<2048x16xf32, #tpu.memory_space<any>> -> memref<8x16xf32, #tpu.memory_space<any>>
      %8 = tpu.memref_slice %arg5[%c0_i32_4] : memref<2x!tpu.dma_semaphore, #tpu.memory_space<semaphore_mem>> -> memref<1x!tpu.dma_semaphore, #tpu.memory_space<semaphore_mem>>
      %9 = tpu.memref_squeeze %8 : memref<1x!tpu.dma_semaphore, #tpu.memory_space<semaphore_mem>> -> memref<!tpu.dma_semaphore, #tpu.memory_space<semaphore_mem>>
      tpu.enqueue_dma source(%arg4 : memref<8x16xf32, #tpu.memory_space<vmem>>) target(%7 : memref<8x16xf32, #tpu.memory_space<any>>) target_semaphore(%9 : memref<!tpu.dma_semaphore, #tpu.memory_space<semaphore_mem>>)
      %c0_i32_6 = arith.constant 0 : i32
      %10 = arith.subi %2, %c0_i32_6 : i32
      %c1_i32 = arith.constant 1 : i32
      %c1_i32_7 = arith.constant 1 : i32
      %11 = arith.subi %c1_i32, %c1_i32_7 : i32
      %12 = arith.addi %10, %11 : i32
      %c1_i32_8 = arith.constant 1 : i32
      %13 = arith.divsi %12, %c1_i32_8 : i32
      %c1_i32_9 = arith.constant 1 : i32
      %c0_i32_10 = arith.constant 0 : i32
      %c0_i32_11 = arith.constant 0 : i32
      %14 = arith.subi %13, %c0_i32_11 : i32
      %15 = arith.addi %c0_i32_11, %14 : i32
      %c1_i32_12 = arith.constant 1 : i32
      scf.for %arg6 = %c0_i32_11 to %15 step %c1_i32_12  : i32 {
        %16 = arith.muli %arg6, %c1_i32_9 : i32
        %17 = arith.addi %c0_i32_10, %16 : i32
        %c2_i32 = arith.constant 2 : i32
        %c0_i32_13 = arith.constant 0 : i32
        %18 = arith.cmpi eq, %c2_i32, %c0_i32_13 : i32
        %c1_i32_14 = arith.constant 1 : i32
        %19 = arith.select %18, %c1_i32_14, %c2_i32 : i32
        %20 = arith.remsi %17, %19 : i32
        %c0_i32_15 = arith.constant 0 : i32
        %21 = arith.cmpi ne, %20, %c0_i32_15 : i32
        %c0_i32_16 = arith.constant 0 : i32
        %22 = arith.cmpi slt, %20, %c0_i32_16 : i32
        %c0_i32_17 = arith.constant 0 : i32
        %23 = arith.cmpi slt, %19, %c0_i32_17 : i32
        %24 = arith.xori %22, %23 : i1
        %25 = arith.andi %24, %21 : i1
        %26 = arith.addi %20, %19 : i32
        %27 = arith.select %25, %26, %20 : i32
        %c1_i32_18 = arith.constant 1 : i32
        %28 = arith.addi %17, %c1_i32_18 : i32
        %29 = arith.cmpi slt, %28, %2 : i32
        %30 = arith.extui %29 : i1 to i32
        %c0_i32_19 = arith.constant 0 : i32
        %31 = arith.cmpi ne, %30, %c0_i32_19 : i32
        scf.if %31 {
          %c1_i32_21 = arith.constant 1 : i32
          %37 = arith.addi %17, %c1_i32_21 : i32
          %c1_i32_22 = arith.constant 1 : i32
          %38 = arith.subi %c1_i32_22, %27 : i32
          %39 = arith.index_cast %37 : i32 to index
          %40 = memref.load %arg1[%39] : memref<64xi32, #tpu.memory_space<smem>>
          %c0_i32_23 = arith.constant 0 : i32
          %41 = tpu.memref_slice %arg3[%40, %c0_i32_23] : memref<2048x16xf32, #tpu.memory_space<any>> -> memref<8x16xf32, #tpu.memory_space<any>>
          %42 = tpu.memref_slice %arg5[%38] : memref<2x!tpu.dma_semaphore, #tpu.memory_space<semaphore_mem>> -> memref<1x!tpu.dma_semaphore, #tpu.memory_space<semaphore_mem>>
          %43 = tpu.memref_squeeze %42 : memref<1x!tpu.dma_semaphore, #tpu.memory_space<semaphore_mem>> -> memref<!tpu.dma_semaphore, #tpu.memory_space<semaphore_mem>>
          tpu.enqueue_dma source(%arg4 : memref<8x16xf32, #tpu.memory_space<vmem>>) target(%41 : memref<8x16xf32, #tpu.memory_space<any>>) target_semaphore(%43 : memref<!tpu.dma_semaphore, #tpu.memory_space<semaphore_mem>>)
        } else {
        }
        %32 = arith.index_cast %17 : i32 to index
        %33 = memref.load %arg1[%32] : memref<64xi32, #tpu.memory_space<smem>>
        %c0_i32_20 = arith.constant 0 : i32
        %34 = tpu.memref_slice %arg3[%33, %c0_i32_20] : memref<2048x16xf32, #tpu.memory_space<any>> -> memref<8x16xf32, #tpu.memory_space<any>>
        %35 = tpu.memref_slice %arg5[%27] : memref<2x!tpu.dma_semaphore, #tpu.memory_space<semaphore_mem>> -> memref<1x!tpu.dma_semaphore, #tpu.memory_space<semaphore_mem>>
        %36 = tpu.memref_squeeze %35 : memref<1x!tpu.dma_semaphore, #tpu.memory_space<semaphore_mem>> -> memref<!tpu.dma_semaphore, #tpu.memory_space<semaphore_mem>>
        tpu.wait_dma2 semaphore(%36 : memref<!tpu.dma_semaphore, #tpu.memory_space<semaphore_mem>>) src(%arg4 : memref<8x16xf32, #tpu.memory_space<vmem>>) dst(%34 : memref<8x16xf32, #tpu.memory_space<any>>)
      }
    } else {
    }
    return
  }
}

</mosaic_0001>

<llo_original>
// kernel: mask_encoding.1
$region0: #{mask_encoding.1}
  #allocation0 [shape = 'u32[]', space=smem, size = 0x4, offset = 0x4, fixed_abs, tag = 'smem constant byte address 0x4 - core index']
  #allocation1 [shape = 'u32[72,128]{1,0:T(1,128)}', space=vmem, size = 0x9000, scoped, tag = 'internal scratch']
  #allocation2 [shape = 'f32[8,16]{1,0:T(8,128)}', space=vmem, size = 0x1000, scoped, tag = 'scratch operand']
  #allocation3 [shape = 's32[2]{0}', space=sflag, size = 0x8, scoped, tag = 'scratch operand']
  #allocation4 [shape = 's32[1]{0:T(128)S(6)}', space=smem, size = 0x200, scoped, tag = 'scoped memory for mask_encoding.1']
  #allocation7 [shape = 's32[]', space=sflag, size = 0x4, offset = 0, fixed_abs, tag = 'sflag constant byte address 0x0 - dummy sync flag']
  #allocation8 [shape = 's32[]', space=sflag, size = 0x4, offset = 0, fixed_abs, tag = 'sflag constant byte address 0x0 - dummy sync flag']
  %s0 = inlined_call_operand.<no memory space> [shape: s32[1], index: 0, kind: input, shape index: {}]
  %s1 = inlined_call_operand.vmem [shape: s32[64], index: 1, kind: input, shape index: {}]
  %s2 = inlined_call_operand.vmem [shape: f32[2048,16], index: 2, kind: input, shape index: {}, may-alias: {2,3}]
  %s3 = inlined_call_operand.vmem [shape: f32[2048,16], index: 3, kind: output, shape index: {}, may-alias: {2,3}]
  %s4 = sld [smem:[#allocation0]]
  $region97: #{mask_encoding.1} parent=0
    _
  %s6 = ssub.s32 1, %s4
  %s7 = scalar_select 0, %s6, %s4
  %8 = sst [smem:[#allocation4]] %s0
  $region1: #{mask_encoding.1} parent=0
    #allocation5 [shape = 'u8[512]{0}', space=smem, size = 0x200, scoped, tag = 'input window, operand 1, single buffered']
    #allocation6 [shape = 's32[1]{0}', space=sflag, size = 0x4, scoped, tag = 'scoped memory for mask_encoding.1']
    %9 = vsyncpa [#allocation6], 0
    // Predicated region
    $region2: #{mask_encoding.1} parent=1 // pred_check
      _
    $region3: #{mask_encoding.1} parent=1 // pred_check_branch
      %11 = sbr.rel (0) target = $region5
    $region4: #{mask_encoding.1} parent=1 // pred_region
      _
    $region5: #{mask_encoding.1} parent=1 // pred_fallthru
      _
    // Predicated region
    $region6: #{mask_encoding.1} parent=1 // pred_check
      _
    $region7: #{mask_encoding.1} parent=1 // pred_check_branch
      %13 = sbr.rel (0) target = $region9
    $region8: #{mask_encoding.1} parent=1 // pred_region
      %15 = vsyncadd [#allocation6], 0
      %s17 = sshll.u32 %s1, 4
      %s18 = int_to_ptr.vmem [resolvable:$true] %s17
      %20 = dma.vmem_to_smem %s18, 16, [#allocation5], [#allocation6]
    $region9: #{mask_encoding.1} parent=1 // pred_fallthru
      _
    // Predicated region
    $region10: #{mask_encoding.1} parent=1 // pred_check
      _
    $region11: #{mask_encoding.1} parent=1 // pred_check_branch
      %22 = sbr.rel (0) target = $region13
    $region12: #{mask_encoding.1} parent=1 // pred_region
      %24 = dma.done [#allocation6], 16
    $region13: #{mask_encoding.1} parent=1 // pred_fallthru
      _
    %25 = sfence
    %vm26 = vcmask 130048
    %27 = vst.msk [vmem:[#allocation2] sm:$0xff] %vm26, 0.0
    %s28 = sld [smem:[#allocation4]]
    %p29 = scmp.gt.s32.totalorder %s28, 0
    // Predicated region
    $region14: #{mask_encoding.1} parent=1 // pred_check
      %p30 = pneg %p29
    $region15: #{mask_encoding.1} parent=1 // pred_check_branch
      %32 = sbr.rel (%p30) target = $region17
    $region16: #{mask_encoding.1} parent=1 // pred_region
      %s33 = sld [smem:[#allocation5]]
      %s34 = scalar_lea.vmem %s3, %s33
      // Predicated region
      $region18: #{mask_encoding.1} parent=16 // pred_check
        _
      $region19: #{mask_encoding.1} parent=16 // pred_check_branch
        %36 = sbr.rel (0) target = $region21
      $region20: #{mask_encoding.1} parent=16 // pred_region
        // Predicated region
        $region33: #{mask_encoding.1} parent=20 // pred_check
          _
        $region34: #{mask_encoding.1} parent=20 // pred_check_branch
          %52 = sbr.rel (0) target = $region36
        $region35: #{mask_encoding.1} parent=20 // pred_region
          loop: start=0, step=1, limit=1
          $region37: #{mask_encoding.1} parent=35 // loop_pre_header
            _
          $region38: #{mask_encoding.1} parent=35 // loop_header
            %s54 = sphi 0, %s58
            %p55 = scmp.ge.s32.totalorder %s54, 1
            %s59 = sphi [#allocation2], [#allocation2]
            %s60 = sphi %s34, %s34
          $region39: #{mask_encoding.1} parent=35 // loop_header_branch
            %57 = sbr.rel (%p55) target = $region43
          $region40: #{mask_encoding.1} parent=35 // loop_body
            %v61 = vld [vmem:[%s59] sm:$0xff]
            %62 = vst [vmem:[%s60] sm:$0xff] %v61
          $region41: #{mask_encoding.1} parent=35 // loop_footer
            %s58 = sadd.s32 1, %s54
          $region42: #{mask_encoding.1} parent=35 // loop_footer_branch
            %53 = sbr.rel target = $region38
          $region43: #{mask_encoding.1} parent=35 // loop_exit
            _
        $region36: #{mask_encoding.1} parent=20 // pred_fallthru
          _
        // Predicated region
        $region44: #{mask_encoding.1} parent=20 // pred_check
          _
        $region45: #{mask_encoding.1} parent=20 // pred_check_branch
          %64 = sbr.rel target = $region47
        $region46: #{mask_encoding.1} parent=20 // pred_region
          _
        $region47: #{mask_encoding.1} parent=20 // pred_fallthru
          _
      $region21: #{mask_encoding.1} parent=16 // pred_fallthru
        _
      // Predicated region
      $region22: #{mask_encoding.1} parent=16 // pred_check
        _
      $region23: #{mask_encoding.1} parent=16 // pred_check_branch
        %38 = sbr.rel target = $region25
      $region24: #{mask_encoding.1} parent=16 // pred_region
        %s40 = ssub.s32 256, 1
        loop: start=0, step=1, limit=1
        $region26: #{mask_encoding.1} parent=24 // loop_pre_header
          _
        $region27: #{mask_encoding.1} parent=24 // loop_header
          %s42 = sphi 0, %s46
          %p43 = scmp.ge.s32.totalorder %s42, 1
          %s47 = sphi [#allocation2], [#allocation2]
          %s48 = sphi %s34, %s34
        $region28: #{mask_encoding.1} parent=24 // loop_header_branch
          %45 = sbr.rel (%p43) target = $region32
        $region29: #{mask_encoding.1} parent=24 // loop_body
          %v49 = vld [vmem:[%s47] sm:%s40]
          %50 = vst [vmem:[%s48] sm:%s40] %v49
        $region30: #{mask_encoding.1} parent=24 // loop_footer
          %s46 = sadd.s32 1, %s42
        $region31: #{mask_encoding.1} parent=24 // loop_footer_branch
          %41 = sbr.rel target = $region27
        $region32: #{mask_encoding.1} parent=24 // loop_exit
          _
      $region25: #{mask_encoding.1} parent=16 // pred_fallthru
        _
      // Predicated region
      $region48: #{mask_encoding.1} parent=16 // pred_check
        _
      $region49: #{mask_encoding.1} parent=16 // pred_check_branch
        %67 = sbr.rel (0) target = $region51
      $region50: #{mask_encoding.1} parent=16 // pred_region
        %68 = vsyncadd [#allocation3], 128
      $region51: #{mask_encoding.1} parent=16 // pred_fallthru
        _
      // While loop
      $region52: #{mask_encoding.1} parent=16 // loop_pre_header
        _
      $region53: #{mask_encoding.1} parent=16 // loop_header
        %s70 = sphi 0, %s72
        %p71 = scmp.ge.s32.totalorder %s70, %s28
      $region54: #{mask_encoding.1} parent=16 // loop_header_branch
        %74 = sbr.rel (%p71) target = $region58
      $region55: #{mask_encoding.1} parent=16 // loop_body
        %p75 = scmp.lt.s32.totalorder %s70, 0
        %s76 = ssub.s32 0, %s70
        %s77 = scalar_select %p75, %s76, %s70
        %s78 = sand.u32 %s77, 1
        %s79 = ssub.s32 0, %s78
        %s80 = scalar_select %p75, %s79, %s78
        %p81 = scmp.ne.s32.totalorder %s80, 0
        %p82 = scmp.lt.s32.totalorder %s80, 0
        %p83 = pnand %p82, %p81
        %p84 = pneg %p83
        %s85 = sadd.s32 %s80, 2
        %s86 = scalar_select %p84, %s85, %s80
        %s87 = sadd.s32 %s70, 1
        %p88 = scmp.lt.s32.totalorder %s87, %s28
        // Predicated region
        $region59: #{mask_encoding.1} parent=55 // pred_check
          %p89 = pneg %p88
        $region60: #{mask_encoding.1} parent=55 // pred_check_branch
          %91 = sbr.rel (%p89) target = $region62
        $region61: #{mask_encoding.1} parent=55 // pred_region
          %s92 = ssub.s32 1, %s86
          %s93 = sld [smem:[#allocation5 + %s87]]
          %s94 = scalar_lea.vmem %s3, %s93
          %s95 = scalar_lea.sflag [#allocation3], %s92
          // Predicated region
          $region63: #{mask_encoding.1} parent=61 // pred_check
            _
          $region64: #{mask_encoding.1} parent=61 // pred_check_branch
            %97 = sbr.rel (0) target = $region66
          $region65: #{mask_encoding.1} parent=61 // pred_region
            // Predicated region
            $region78: #{mask_encoding.1} parent=65 // pred_check
              _
            $region79: #{mask_encoding.1} parent=65 // pred_check_branch
              %113 = sbr.rel (0) target = $region81
            $region80: #{mask_encoding.1} parent=65 // pred_region
              loop: start=0, step=1, limit=1
              $region82: #{mask_encoding.1} parent=80 // loop_pre_header
                _
              $region83: #{mask_encoding.1} parent=80 // loop_header
                %s115 = sphi 0, %s119
                %p116 = scmp.ge.s32.totalorder %s115, 1
                %s120 = sphi [#allocation2], [#allocation2]
                %s121 = sphi %s94, %s94
              $region84: #{mask_encoding.1} parent=80 // loop_header_branch
                %118 = sbr.rel (%p116) target = $region88
              $region85: #{mask_encoding.1} parent=80 // loop_body
                %v122 = vld [vmem:[%s120] sm:$0xff]
                %123 = vst [vmem:[%s121] sm:$0xff] %v122
              $region86: #{mask_encoding.1} parent=80 // loop_footer
                %s119 = sadd.s32 1, %s115
              $region87: #{mask_encoding.1} parent=80 // loop_footer_branch
                %114 = sbr.rel target = $region83
              $region88: #{mask_encoding.1} parent=80 // loop_exit
                _
            $region81: #{mask_encoding.1} parent=65 // pred_fallthru
              _
            // Predicated region
            $region89: #{mask_encoding.1} parent=65 // pred_check
              _
            $region90: #{mask_encoding.1} parent=65 // pred_check_branch
              %125 = sbr.rel target = $region92
            $region91: #{mask_encoding.1} parent=65 // pred_region
              _
            $region92: #{mask_encoding.1} parent=65 // pred_fallthru
              _
          $region66: #{mask_encoding.1} parent=61 // pred_fallthru
            _
          // Predicated region
          $region67: #{mask_encoding.1} parent=61 // pred_check
            _
          $region68: #{mask_encoding.1} parent=61 // pred_check_branch
            %99 = sbr.rel target = $region70
          $region69: #{mask_encoding.1} parent=61 // pred_region
            %s101 = ssub.s32 256, 1
            loop: start=0, step=1, limit=1
            $region71: #{mask_encoding.1} parent=69 // loop_pre_header
              _
            $region72: #{mask_encoding.1} parent=69 // loop_header
              %s103 = sphi 0, %s107
              %p104 = scmp.ge.s32.totalorder %s103, 1
              %s108 = sphi [#allocation2], [#allocation2]
              %s109 = sphi %s94, %s94
            $region73: #{mask_encoding.1} parent=69 // loop_header_branch
              %106 = sbr.rel (%p104) target = $region77
            $region74: #{mask_encoding.1} parent=69 // loop_body
              %v110 = vld [vmem:[%s108] sm:%s101]
              %111 = vst [vmem:[%s109] sm:%s101] %v110
            $region75: #{mask_encoding.1} parent=69 // loop_footer
              %s107 = sadd.s32 1, %s103
            $region76: #{mask_encoding.1} parent=69 // loop_footer_branch
              %102 = sbr.rel target = $region72
            $region77: #{mask_encoding.1} parent=69 // loop_exit
              _
          $region70: #{mask_encoding.1} parent=61 // pred_fallthru
            _
          // Predicated region
          $region93: #{mask_encoding.1} parent=61 // pred_check
            _
          $region94: #{mask_encoding.1} parent=61 // pred_check_branch
            %128 = sbr.rel (0) target = $region96
          $region95: #{mask_encoding.1} parent=61 // pred_region
            %129 = vsyncadd %s95, 128
          $region96: #{mask_encoding.1} parent=61 // pred_fallthru
            _
        $region62: #{mask_encoding.1} parent=55 // pred_fallthru
          _
        %s130 = sld [smem:[#allocation5 + %s70]]
        %s131 = scalar_lea.sflag [#allocation3], %s86
        %s132 = smul.u32 8, 1
        %s133 = sshll.u32 %s132, 4
        %134 = dma.done %s131, %s133
      $region56: #{mask_encoding.1} parent=16 // loop_footer
        %s72 = sadd.s32 %s70, 1
      $region57: #{mask_encoding.1} parent=16 // loop_footer_branch
        %69 = sbr.rel target = $region53
      $region58: #{mask_encoding.1} parent=16 // loop_exit
        _
    $region17: #{mask_encoding.1} parent=1 // pred_fallthru
      _
    %135 = vsyncpa [#allocation6], 1
  %136 = vsyncmov [#allocation3]
  %s137 = vpop.sfrf %136
  %p138 = scmp.eq.s32.totalorder %s137, 0
  %p139 = pneg %p138
  %141 = shalt.err (%p139)
  %s142 = scalar_lea.sflag [#allocation3], 1
  %143 = vsyncmov %s142
  %s144 = vpop.sfrf %143
  %p145 = scmp.eq.s32.totalorder %s144, 0
  %p146 = pneg %p145
  %148 = shalt.err (%p146)

</llo_original>
